<compile_context>
chip_gen: v5e
topology: v5e:2x2
jax: 0.10.0
libtpu: 0.0.40
codegen_flags: <defaults>
</compile_context>

<pallas_src>
from functools import partial

import jax
import jax.numpy as jnp
from jax.experimental import pallas as pl
from jax.experimental.pallas import tpu as pltpu


def _round_up(x: int, m: int) -> int:
    return (x + m - 1) // m * m


def gru_kernel(x_ref, w_all_ref, b_all_ref, u_zr_ref, u_h_ref,
               out_ref, h_ref, xproj_ref, *,
               t_chunk: int, seq_len: int, hidden_pad: int):
    """One (batch_block, time_chunk) grid step.

    x_ref:     (t_chunk * Bb, D)      this chunk's inputs (time-major rows)
    w_all_ref: (D, 3H)                [W_z | W_r | W_h]
    b_all_ref: (1, 3H)                [b_z | b_r | b_h]
    u_zr_ref:  (H, 2H)                [U_z | U_r]
    u_h_ref:   (H, H)
    out_ref:   (Bb, H)                final hidden state for this batch block
    h_ref:     (Bb, H)  VMEM scratch  carried hidden state across time chunks
    xproj_ref: (t_chunk * Bb, 3H)     VMEM scratch for the hoisted projection
    """
    H = hidden_pad
    Bb = out_ref.shape[0]
    ti = pl.program_id(1)
    n_chunks = pl.num_programs(1)

    @pl.when(ti == 0)
    def _():
        h_ref[...] = jnp.zeros_like(h_ref)

    # Hoisted, time-independent input projection for the whole chunk:
    # one large MXU matmul (f32 accumulate).
    xproj_ref[...] = (
        jnp.dot(x_ref[...], w_all_ref[...], preferred_element_type=jnp.float32)
        + b_all_ref[...])

    def step(tb, h):
        row = pl.multiple_of(tb * Bb, 8)
        xp = xproj_ref[pl.ds(row, Bb), :]                            # (Bb, 3H)
        # Recurrent weights are read from their Refs here (not hoisted) so a
        # single VMEM copy is streamed to the MXU via spare vld slots.
        hu = jnp.dot(h.astype(u_zr_ref.dtype), u_zr_ref[...],
                     preferred_element_type=jnp.float32)             # (Bb, 2H)
        z = jax.nn.sigmoid(xp[:, :H] + hu[:, :H])
        r = jax.nn.sigmoid(xp[:, H:2 * H] + hu[:, H:])
        rh = (r * h).astype(u_h_ref.dtype)
        h_tilde = jnp.tanh(
            xp[:, 2 * H:]
            + jnp.dot(rh, u_h_ref[...], preferred_element_type=jnp.float32))
        h_new = h + z * (h_tilde - h)
        if seq_len % t_chunk != 0:
            # Only the last chunk can contain padded (invalid) timesteps.
            valid = (ti * t_chunk + tb) < seq_len
            h_new = jnp.where(valid, h_new, h)
        return h_new

    h = jax.lax.fori_loop(0, t_chunk, step, h_ref[...], unroll=True)
    h_ref[...] = h

    @pl.when(ti == n_chunks - 1)
    def _():
        out_ref[...] = h.astype(out_ref.dtype)


def gru_forward(inputs, params, *, t_chunk=None, matmul_dtype=jnp.float32):
    """inputs: (batch, seq_len, input_size) -> final hidden (batch, hidden)."""
    batch, seq_len, in_size = inputs.shape
    hidden = params["W_z"].shape[1]

    # Batch blocking: 2 blocks (v7x megacore "parallel" axis) once batch >= 16.
    n_b_blocks = 2 if batch >= 16 else 1
    B = _round_up(batch, 8 * n_b_blocks)
    b_blk = B // n_b_blocks
    # Pad feature dims to the lane width (128); padding is exact for this
    # recurrence (padded hidden columns provably stay zero).
    H = _round_up(hidden, 128)
    D = _round_up(in_size, 128)
    itm = jnp.dtype(matmul_dtype).itemsize

    if t_chunk is None:
        # Size the time chunk so x (double-buffered) + xproj stays ~<= 8 MiB:
        # keeps double-buffering alive even on v7x's 64 MiB VMEM.
        per_step_bytes = b_blk * (2 * D * itm + 3 * H * 4)
        t_chunk = max(1, min(seq_len, (8 << 20) // max(per_step_bytes, 1)))
    t_chunk = max(1, min(int(t_chunk), seq_len))
    n_chunks = pl.cdiv(seq_len, t_chunk)
    seq_pad = n_chunks * t_chunk

    # (batch, seq, in) -> (seq, batch, in), pad, then group by batch block so
    # each grid step reads a contiguous (t_chunk*b_blk, D) slab.  Under jit
    # this whole prep fuses into a single copy.
    x = jnp.transpose(inputs, (1, 0, 2)).astype(matmul_dtype)
    x = jnp.pad(x, ((0, seq_pad - seq_len), (0, B - batch), (0, D - in_size)))
    x = x.reshape(seq_pad, n_b_blocks, b_blk, D).transpose(1, 0, 2, 3)
    x = x.reshape(n_b_blocks, seq_pad * b_blk, D)

    def pad_w(w, rows, cols):
        return jnp.pad(w, ((0, rows - w.shape[0]), (0, cols - w.shape[1])))

    w_all = jnp.concatenate([pad_w(params["W_z"], D, H),
                             pad_w(params["W_r"], D, H),
                             pad_w(params["W_h"], D, H)],
                            axis=1).astype(matmul_dtype)              # (D, 3H)
    b_all = jnp.concatenate([pad_w(params["b_z"], 1, H),
                             pad_w(params["b_r"], 1, H),
                             pad_w(params["b_h"], 1, H)],
                            axis=1).astype(jnp.float32)               # (1, 3H)
    u_zr = jnp.concatenate([pad_w(params["U_z"], H, H),
                            pad_w(params["U_r"], H, H)],
                           axis=1).astype(matmul_dtype)               # (H, 2H)
    u_h = pad_w(params["U_h"], H, H).astype(matmul_dtype)             # (H, H)

    # VMEM budget: double-buffered x chunk + (conservatively) double-buffered
    # weights/output + the two scratch buffers, with headroom.
    weight_bytes = (D * 3 * H + H * 2 * H + H * H) * itm + 3 * H * 4
    io_bytes = 2 * (t_chunk * b_blk * D * itm) + 2 * (b_blk * H * 4)
    scratch_bytes = t_chunk * b_blk * 3 * H * 4 + b_blk * H * 4
    vmem_limit = int(min(2 * weight_bytes + io_bytes + scratch_bytes + (4 << 20),
                         100 << 20))

    grid = (n_b_blocks, n_chunks)
    out_padded = pl.pallas_call(
        partial(gru_kernel, t_chunk=t_chunk, seq_len=seq_len, hidden_pad=H),
        out_shape=jax.ShapeDtypeStruct((B, H), inputs.dtype),
        grid=grid,
        in_specs=[
            pl.BlockSpec((None, t_chunk * b_blk, D), lambda bi, ti: (bi, ti, 0)),
            pl.BlockSpec((D, 3 * H), lambda bi, ti: (0, 0)),
            pl.BlockSpec((1, 3 * H), lambda bi, ti: (0, 0)),
            pl.BlockSpec((H, 2 * H), lambda bi, ti: (0, 0)),
            pl.BlockSpec((H, H), lambda bi, ti: (0, 0)),
        ],
        out_specs=pl.BlockSpec((b_blk, H), lambda bi, ti: (bi, 0)),
        scratch_shapes=[
            pltpu.VMEM((b_blk, H), jnp.float32),                 # carried h
            pltpu.VMEM((t_chunk * b_blk, 3 * H), jnp.float32),   # xproj
        ],
        compiler_params=pltpu.CompilerParams(
            dimension_semantics=("parallel", "arbitrary"),
            vmem_limit_bytes=vmem_limit),
    )(x, w_all, b_all, u_zr, u_h)

    return out_padded[:batch, :hidden]


def gru_reference(inputs, params):
    """Plain-JAX reference matching the PyTorch GRUCell/GRU semantics."""
    batch = inputs.shape[0]
    hidden = params["W_z"].shape[1]
    P = jax.lax.Precision.HIGHEST

    def cell(h, x):
        z = jax.nn.sigmoid(jnp.dot(x, params["W_z"], precision=P)
                           + params["b_z"][0]
                           + jnp.dot(h, params["U_z"], precision=P))
        r = jax.nn.sigmoid(jnp.dot(x, params["W_r"], precision=P)
                           + params["b_r"][0]
                           + jnp.dot(h, params["U_r"], precision=P))
        h_tilde = jnp.tanh(jnp.dot(x, params["W_h"], precision=P)
                           + params["b_h"][0]
                           + jnp.dot(r * h, params["U_h"], precision=P))
        h_new = (1.0 - z) * h + z * h_tilde
        return h_new, None

    h0 = jnp.zeros((batch, hidden), jnp.float32)
    h_final, _ = jax.lax.scan(cell, h0, jnp.transpose(inputs, (1, 0, 2)))
    return h_final


def init_params(key, input_size, hidden_size):
    ks = jax.random.split(key, 9)

    # Stored as (in_features, out_features) so y = x @ W + b (== torch Linear).
    def lin(k, fan_in, fan_out):
        bound = 1.0 / jnp.sqrt(fan_in)
        return jax.random.uniform(k, (fan_in, fan_out), jnp.float32, -bound, bound)

    def bias(k, fan_in, fan_out):
        bound = 1.0 / jnp.sqrt(fan_in)
        return jax.random.uniform(k, (1, fan_out), jnp.float32, -bound, bound)

    return {
        "W_z": lin(ks[0], input_size, hidden_size),
        "W_r": lin(ks[1], input_size, hidden_size),
        "W_h": lin(ks[2], input_size, hidden_size),
        "U_z": lin(ks[3], hidden_size, hidden_size),
        "U_r": lin(ks[4], hidden_size, hidden_size),
        "U_h": lin(ks[5], hidden_size, hidden_size),
        "b_z": bias(ks[6], input_size, hidden_size),
        "b_r": bias(ks[7], input_size, hidden_size),
        "b_h": bias(ks[8], input_size, hidden_size),
    }


if __name__ == "__main__":
    batch, seq_len, input_size, hidden_size = 2, 8, 16, 32

    key = jax.random.PRNGKey(0)
    k_param, k_x = jax.random.split(key)
    params = init_params(k_param, input_size, hidden_size)
    inputs = jax.random.normal(k_x, (batch, seq_len, input_size), jnp.float32)

    # t_chunk=4 -> a 2-step time grid, exercising the carried-h streaming path.
    gru = jax.jit(partial(gru_forward, t_chunk=4))
    h_kernel = jax.block_until_ready(gru(inputs, params))
    h_ref = jax.block_until_ready(gru_reference(inputs, params))

    assert h_kernel.shape == (batch, hidden_size)
    assert jnp.allclose(h_kernel, h_ref, atol=1e-4, rtol=1e-4), (
        "Pallas GRU output does not match reference")
    print("KERNEL_OK")
</pallas_src>

<mosaic_0001>
module attributes {stable_mosaic.version = 11 : i64} {
  func.func @gru_kernel(%arg0: i32, %arg1: i32, %arg2: memref<1x32x128xf32, #tpu.memory_space<vmem>>, %arg3: memref<128x384xf32, #tpu.memory_space<vmem>>, %arg4: memref<1x384xf32, #tpu.memory_space<vmem>>, %arg5: memref<128x256xf32, #tpu.memory_space<vmem>>, %arg6: memref<128x128xf32, #tpu.memory_space<vmem>>, %arg7: memref<8x128xf32, #tpu.memory_space<vmem>>, %arg8: memref<8x128xf32, #tpu.memory_space<vmem>>, %arg9: memref<32x384xf32, #tpu.memory_space<vmem>>) attributes {dimension_semantics = [#tpu.dimension_semantics<parallel>, #tpu.dimension_semantics<arbitrary>], iteration_bounds = array<i64: 1, 2>, scalar_prefetch = 0 : i64, scratch_operands = 2 : i64, tpu.core_type = #tpu.core_type<tc>, window_params = [{transform_indices = @transform_0, window_bounds = array<i64: 1, 32, 128>}, {pipeline_mode = #tpu.pipeline_mode<synchronous>, transform_indices = @transform_1, window_bounds = array<i64: 128, 384>}, {pipeline_mode = #tpu.pipeline_mode<synchronous>, transform_indices = @transform_2, window_bounds = array<i64: 1, 384>}, {pipeline_mode = #tpu.pipeline_mode<synchronous>, transform_indices = @transform_3, window_bounds = array<i64: 128, 256>}, {pipeline_mode = #tpu.pipeline_mode<synchronous>, transform_indices = @transform_4, window_bounds = array<i64: 128, 128>}, {transform_indices = @transform_5, window_bounds = array<i64: 8, 128>}]} {
    %c0_i32 = arith.constant 0 : i32
    %0 = arith.cmpi eq, %arg1, %c0_i32 : i32
    %1 = arith.extui %0 : i1 to i32
    %c0_i32_0 = arith.constant 0 : i32
    %2 = arith.cmpi ne, %1, %c0_i32_0 : i32
    scf.if %2 {
      %cst_55 = arith.constant 0.000000e+00 : f32
      %140 = vector.broadcast %cst_55 : f32 to vector<8x128xf32>
      %c0_56 = arith.constant 0 : index
      %c0_57 = arith.constant 0 : index
      %141 = vector.load %arg8[%c0_56, %c0_57] : memref<8x128xf32, #tpu.memory_space<vmem>>, vector<8x128xf32>
      tpu.vector_store %arg8[%c0_56, %c0_57], %140 {strides = array<i32>} : memref<8x128xf32, #tpu.memory_space<vmem>>, vector<8x128xf32>,
    } else {
    }
    %c0 = arith.constant 0 : index
    %c0_1 = arith.constant 0 : index
    %c0_2 = arith.constant 0 : index
    %3 = vector.load %arg2[%c0, %c0_1, %c0_2] : memref<1x32x128xf32, #tpu.memory_space<vmem>>, vector<1x32x128xf32>
    %4 = vector.shape_cast %3 : vector<1x32x128xf32> to vector<32x128xf32>
    %c0_3 = arith.constant 0 : index
    %c0_4 = arith.constant 0 : index
    %5 = vector.load %arg3[%c0_3, %c0_4] : memref<128x384xf32, #tpu.memory_space<vmem>>, vector<128x384xf32>
    %cst = arith.constant dense<0.000000e+00> : vector<32x384xf32>
    %6 = tpu.matmul %4, %5, %cst {dimension_numbers = #tpu.dot_dimension_numbers<[1], [0], [0], [1], [0, 0, 1, 1], [], []>} : vector<32x128xf32>, vector<128x384xf32>, vector<32x384xf32> -> vector<32x384xf32>
    %c0_5 = arith.constant 0 : index
    %c0_6 = arith.constant 0 : index
    %7 = vector.load %arg4[%c0_5, %c0_6] : memref<1x384xf32, #tpu.memory_space<vmem>>, vector<1x384xf32>
    %8 = vector.broadcast %7 : vector<1x384xf32> to vector<32x384xf32>
    %9 = arith.addf %6, %8 : vector<32x384xf32>
    %c0_7 = arith.constant 0 : index
    %c0_8 = arith.constant 0 : index
    %10 = vector.load %arg9[%c0_7, %c0_8] : memref<32x384xf32, #tpu.memory_space<vmem>>, vector<32x384xf32>
    tpu.vector_store %arg9[%c0_7, %c0_8], %9 {strides = array<i32>} : memref<32x384xf32, #tpu.memory_space<vmem>>, vector<32x384xf32>,
    %c0_9 = arith.constant 0 : index
    %c0_10 = arith.constant 0 : index
    %11 = vector.load %arg8[%c0_9, %c0_10] : memref<8x128xf32, #tpu.memory_space<vmem>>, vector<8x128xf32>
    %c0_i32_11 = arith.constant 0 : i32
    %c8_i32 = arith.constant 8 : i32
    %12 = arith.muli %c0_i32_11, %c8_i32 : i32
    %13 = tpu.assume_multiple %12, 8 : i32
    %14 = arith.index_cast %13 : i32 to index
    %c0_12 = arith.constant 0 : index
    %15 = vector.load %arg9[%14, %c0_12] : memref<32x384xf32, #tpu.memory_space<vmem>>, vector<8x384xf32>
    %c0_13 = arith.constant 0 : index
    %c0_14 = arith.constant 0 : index
    %16 = vector.load %arg5[%c0_13, %c0_14] : memref<128x256xf32, #tpu.memory_space<vmem>>, vector<128x256xf32>
    %cst_15 = arith.constant dense<0.000000e+00> : vector<8x256xf32>
    %17 = tpu.matmul %11, %16, %cst_15 {dimension_numbers = #tpu.dot_dimension_numbers<[1], [0], [0], [1], [0, 0, 1, 1], [], []>} : vector<8x128xf32>, vector<128x256xf32>, vector<8x256xf32> -> vector<8x256xf32>
    %18 = vector.extract_strided_slice %15 {offsets = [0, 0], sizes = [8, 128], strides = [1, 1]} : vector<8x384xf32> to vector<8x128xf32>
    %19 = vector.extract_strided_slice %17 {offsets = [0, 0], sizes = [8, 128], strides = [1, 1]} : vector<8x256xf32> to vector<8x128xf32>
    %20 = arith.addf %18, %19 : vector<8x128xf32>
    %21 = arith.negf %20 : vector<8x128xf32>
    %22 = math.exp %21 : vector<8x128xf32>
    %cst_16 = arith.constant 1.000000e+00 : f32
    %23 = vector.broadcast %cst_16 : f32 to vector<8x128xf32>
    %24 = arith.addf %23, %22 : vector<8x128xf32>
    %25 = arith.divf %23, %24 : vector<8x128xf32>
    %26 = vector.extract_strided_slice %15 {offsets = [0, 128], sizes = [8, 128], strides = [1, 1]} : vector<8x384xf32> to vector<8x128xf32>
    %27 = vector.extract_strided_slice %17 {offsets = [0, 128], sizes = [8, 128], strides = [1, 1]} : vector<8x256xf32> to vector<8x128xf32>
    %28 = arith.addf %26, %27 : vector<8x128xf32>
    %29 = arith.negf %28 : vector<8x128xf32>
    %30 = math.exp %29 : vector<8x128xf32>
    %cst_17 = arith.constant 1.000000e+00 : f32
    %31 = vector.broadcast %cst_17 : f32 to vector<8x128xf32>
    %32 = arith.addf %31, %30 : vector<8x128xf32>
    %33 = arith.divf %31, %32 : vector<8x128xf32>
    %34 = arith.mulf %33, %11 : vector<8x128xf32>
    %35 = vector.extract_strided_slice %15 {offsets = [0, 256], sizes = [8, 128], strides = [1, 1]} : vector<8x384xf32> to vector<8x128xf32>
    %c0_18 = arith.constant 0 : index
    %c0_19 = arith.constant 0 : index
    %36 = vector.load %arg6[%c0_18, %c0_19] : memref<128x128xf32, #tpu.memory_space<vmem>>, vector<128x128xf32>
    %cst_20 = arith.constant dense<0.000000e+00> : vector<8x128xf32>
    %37 = tpu.matmul %34, %36, %cst_20 {dimension_numbers = #tpu.dot_dimension_numbers<[1], [0], [0], [1], [0, 0, 1, 1], [], []>} : vector<8x128xf32>, vector<128x128xf32>, vector<8x128xf32> -> vector<8x128xf32>
    %38 = arith.addf %35, %37 : vector<8x128xf32>
    %39 = math.tanh %38 : vector<8x128xf32>
    %40 = arith.subf %39, %11 : vector<8x128xf32>
    %41 = arith.mulf %25, %40 : vector<8x128xf32>
    %42 = arith.addf %11, %41 : vector<8x128xf32>
    %c1_i32 = arith.constant 1 : i32
    %c8_i32_21 = arith.constant 8 : i32
    %43 = arith.muli %c1_i32, %c8_i32_21 : i32
    %44 = tpu.assume_multiple %43, 8 : i32
    %45 = arith.index_cast %44 : i32 to index
    %c0_22 = arith.constant 0 : index
    %46 = vector.load %arg9[%45, %c0_22] : memref<32x384xf32, #tpu.memory_space<vmem>>, vector<8x384xf32>
    %c0_23 = arith.constant 0 : index
    %c0_24 = arith.constant 0 : index
    %47 = vector.load %arg5[%c0_23, %c0_24] : memref<128x256xf32, #tpu.memory_space<vmem>>, vector<128x256xf32>
    %cst_25 = arith.constant dense<0.000000e+00> : vector<8x256xf32>
    %48 = tpu.matmul %42, %47, %cst_25 {dimension_numbers = #tpu.dot_dimension_numbers<[1], [0], [0], [1], [0, 0, 1, 1], [], []>} : vector<8x128xf32>, vector<128x256xf32>, vector<8x256xf32> -> vector<8x256xf32>
    %49 = vector.extract_strided_slice %46 {offsets = [0, 0], sizes = [8, 128], strides = [1, 1]} : vector<8x384xf32> to vector<8x128xf32>
    %50 = vector.extract_strided_slice %48 {offsets = [0, 0], sizes = [8, 128], strides = [1, 1]} : vector<8x256xf32> to vector<8x128xf32>
    %51 = arith.addf %49, %50 : vector<8x128xf32>
    %52 = arith.negf %51 : vector<8x128xf32>
    %53 = math.exp %52 : vector<8x128xf32>
    %cst_26 = arith.constant 1.000000e+00 : f32
    %54 = vector.broadcast %cst_26 : f32 to vector<8x128xf32>
    %55 = arith.addf %54, %53 : vector<8x128xf32>
    %56 = arith.divf %54, %55 : vector<8x128xf32>
    %57 = vector.extract_strided_slice %46 {offsets = [0, 128], sizes = [8, 128], strides = [1, 1]} : vector<8x384xf32> to vector<8x128xf32>
    %58 = vector.extract_strided_slice %48 {offsets = [0, 128], sizes = [8, 128], strides = [1, 1]} : vector<8x256xf32> to vector<8x128xf32>
    %59 = arith.addf %57, %58 : vector<8x128xf32>
    %60 = arith.negf %59 : vector<8x128xf32>
    %61 = math.exp %60 : vector<8x128xf32>
    %cst_27 = arith.constant 1.000000e+00 : f32
    %62 = vector.broadcast %cst_27 : f32 to vector<8x128xf32>
    %63 = arith.addf %62, %61 : vector<8x128xf32>
    %64 = arith.divf %62, %63 : vector<8x128xf32>
    %65 = arith.mulf %64, %42 : vector<8x128xf32>
    %66 = vector.extract_strided_slice %46 {offsets = [0, 256], sizes = [8, 128], strides = [1, 1]} : vector<8x384xf32> to vector<8x128xf32>
    %c0_28 = arith.constant 0 : index
    %c0_29 = arith.constant 0 : index
    %67 = vector.load %arg6[%c0_28, %c0_29] : memref<128x128xf32, #tpu.memory_space<vmem>>, vector<128x128xf32>
    %cst_30 = arith.constant dense<0.000000e+00> : vector<8x128xf32>
    %68 = tpu.matmul %65, %67, %cst_30 {dimension_numbers = #tpu.dot_dimension_numbers<[1], [0], [0], [1], [0, 0, 1, 1], [], []>} : vector<8x128xf32>, vector<128x128xf32>, vector<8x128xf32> -> vector<8x128xf32>
    %69 = arith.addf %66, %68 : vector<8x128xf32>
    %70 = math.tanh %69 : vector<8x128xf32>
    %71 = arith.subf %70, %42 : vector<8x128xf32>
    %72 = arith.mulf %56, %71 : vector<8x128xf32>
    %73 = arith.addf %42, %72 : vector<8x128xf32>
    %c2_i32 = arith.constant 2 : i32
    %c8_i32_31 = arith.constant 8 : i32
    %74 = arith.muli %c2_i32, %c8_i32_31 : i32
    %75 = tpu.assume_multiple %74, 8 : i32
    %76 = arith.index_cast %75 : i32 to index
    %c0_32 = arith.constant 0 : index
    %77 = vector.load %arg9[%76, %c0_32] : memref<32x384xf32, #tpu.memory_space<vmem>>, vector<8x384xf32>
    %c0_33 = arith.constant 0 : index
    %c0_34 = arith.constant 0 : index
    %78 = vector.load %arg5[%c0_33, %c0_34] : memref<128x256xf32, #tpu.memory_space<vmem>>, vector<128x256xf32>
    %cst_35 = arith.constant dense<0.000000e+00> : vector<8x256xf32>
    %79 = tpu.matmul %73, %78, %cst_35 {dimension_numbers = #tpu.dot_dimension_numbers<[1], [0], [0], [1], [0, 0, 1, 1], [], []>} : vector<8x128xf32>, vector<128x256xf32>, vector<8x256xf32> -> vector<8x256xf32>
    %80 = vector.extract_strided_slice %77 {offsets = [0, 0], sizes = [8, 128], strides = [1, 1]} : vector<8x384xf32> to vector<8x128xf32>
    %81 = vector.extract_strided_slice %79 {offsets = [0, 0], sizes = [8, 128], strides = [1, 1]} : vector<8x256xf32> to vector<8x128xf32>
    %82 = arith.addf %80, %81 : vector<8x128xf32>
    %83 = arith.negf %82 : vector<8x128xf32>
    %84 = math.exp %83 : vector<8x128xf32>
    %cst_36 = arith.constant 1.000000e+00 : f32
    %85 = vector.broadcast %cst_36 : f32 to vector<8x128xf32>
    %86 = arith.addf %85, %84 : vector<8x128xf32>
    %87 = arith.divf %85, %86 : vector<8x128xf32>
    %88 = vector.extract_strided_slice %77 {offsets = [0, 128], sizes = [8, 128], strides = [1, 1]} : vector<8x384xf32> to vector<8x128xf32>
    %89 = vector.extract_strided_slice %79 {offsets = [0, 128], sizes = [8, 128], strides = [1, 1]} : vector<8x256xf32> to vector<8x128xf32>
    %90 = arith.addf %88, %89 : vector<8x128xf32>
    %91 = arith.negf %90 : vector<8x128xf32>
    %92 = math.exp %91 : vector<8x128xf32>
    %cst_37 = arith.constant 1.000000e+00 : f32
    %93 = vector.broadcast %cst_37 : f32 to vector<8x128xf32>
    %94 = arith.addf %93, %92 : vector<8x128xf32>
    %95 = arith.divf %93, %94 : vector<8x128xf32>
    %96 = arith.mulf %95, %73 : vector<8x128xf32>
    %97 = vector.extract_strided_slice %77 {offsets = [0, 256], sizes = [8, 128], strides = [1, 1]} : vector<8x384xf32> to vector<8x128xf32>
    %c0_38 = arith.constant 0 : index
    %c0_39 = arith.constant 0 : index
    %98 = vector.load %arg6[%c0_38, %c0_39] : memref<128x128xf32, #tpu.memory_space<vmem>>, vector<128x128xf32>
    %cst_40 = arith.constant dense<0.000000e+00> : vector<8x128xf32>
    %99 = tpu.matmul %96, %98, %cst_40 {dimension_numbers = #tpu.dot_dimension_numbers<[1], [0], [0], [1], [0, 0, 1, 1], [], []>} : vector<8x128xf32>, vector<128x128xf32>, vector<8x128xf32> -> vector<8x128xf32>
    %100 = arith.addf %97, %99 : vector<8x128xf32>
    %101 = math.tanh %100 : vector<8x128xf32>
    %102 = arith.subf %101, %73 : vector<8x128xf32>
    %103 = arith.mulf %87, %102 : vector<8x128xf32>
    %104 = arith.addf %73, %103 : vector<8x128xf32>
    %c3_i32 = arith.constant 3 : i32
    %c8_i32_41 = arith.constant 8 : i32
    %105 = arith.muli %c3_i32, %c8_i32_41 : i32
    %106 = tpu.assume_multiple %105, 8 : i32
    %107 = arith.index_cast %106 : i32 to index
    %c0_42 = arith.constant 0 : index
    %108 = vector.load %arg9[%107, %c0_42] : memref<32x384xf32, #tpu.memory_space<vmem>>, vector<8x384xf32>
    %c0_43 = arith.constant 0 : index
    %c0_44 = arith.constant 0 : index
    %109 = vector.load %arg5[%c0_43, %c0_44] : memref<128x256xf32, #tpu.memory_space<vmem>>, vector<128x256xf32>
    %cst_45 = arith.constant dense<0.000000e+00> : vector<8x256xf32>
    %110 = tpu.matmul %104, %109, %cst_45 {dimension_numbers = #tpu.dot_dimension_numbers<[1], [0], [0], [1], [0, 0, 1, 1], [], []>} : vector<8x128xf32>, vector<128x256xf32>, vector<8x256xf32> -> vector<8x256xf32>
    %111 = vector.extract_strided_slice %108 {offsets = [0, 0], sizes = [8, 128], strides = [1, 1]} : vector<8x384xf32> to vector<8x128xf32>
    %112 = vector.extract_strided_slice %110 {offsets = [0, 0], sizes = [8, 128], strides = [1, 1]} : vector<8x256xf32> to vector<8x128xf32>
    %113 = arith.addf %111, %112 : vector<8x128xf32>
    %114 = arith.negf %113 : vector<8x128xf32>
    %115 = math.exp %114 : vector<8x128xf32>
    %cst_46 = arith.constant 1.000000e+00 : f32
    %116 = vector.broadcast %cst_46 : f32 to vector<8x128xf32>
    %117 = arith.addf %116, %115 : vector<8x128xf32>
    %118 = arith.divf %116, %117 : vector<8x128xf32>
    %119 = vector.extract_strided_slice %108 {offsets = [0, 128], sizes = [8, 128], strides = [1, 1]} : vector<8x384xf32> to vector<8x128xf32>
    %120 = vector.extract_strided_slice %110 {offsets = [0, 128], sizes = [8, 128], strides = [1, 1]} : vector<8x256xf32> to vector<8x128xf32>
    %121 = arith.addf %119, %120 : vector<8x128xf32>
    %122 = arith.negf %121 : vector<8x128xf32>
    %123 = math.exp %122 : vector<8x128xf32>
    %cst_47 = arith.constant 1.000000e+00 : f32
    %124 = vector.broadcast %cst_47 : f32 to vector<8x128xf32>
    %125 = arith.addf %124, %123 : vector<8x128xf32>
    %126 = arith.divf %124, %125 : vector<8x128xf32>
    %127 = arith.mulf %126, %104 : vector<8x128xf32>
    %128 = vector.extract_strided_slice %108 {offsets = [0, 256], sizes = [8, 128], strides = [1, 1]} : vector<8x384xf32> to vector<8x128xf32>
    %c0_48 = arith.constant 0 : index
    %c0_49 = arith.constant 0 : index
    %129 = vector.load %arg6[%c0_48, %c0_49] : memref<128x128xf32, #tpu.memory_space<vmem>>, vector<128x128xf32>
    %cst_50 = arith.constant dense<0.000000e+00> : vector<8x128xf32>
    %130 = tpu.matmul %127, %129, %cst_50 {dimension_numbers = #tpu.dot_dimension_numbers<[1], [0], [0], [1], [0, 0, 1, 1], [], []>} : vector<8x128xf32>, vector<128x128xf32>, vector<8x128xf32> -> vector<8x128xf32>
    %131 = arith.addf %128, %130 : vector<8x128xf32>
    %132 = math.tanh %131 : vector<8x128xf32>
    %133 = arith.subf %132, %104 : vector<8x128xf32>
    %134 = arith.mulf %118, %133 : vector<8x128xf32>
    %135 = arith.addf %104, %134 : vector<8x128xf32>
    %c4_i32 = arith.constant 4 : i32
    %c0_51 = arith.constant 0 : index
    %c0_52 = arith.constant 0 : index
    %136 = vector.load %arg8[%c0_51, %c0_52] : memref<8x128xf32, #tpu.memory_space<vmem>>, vector<8x128xf32>
    tpu.vector_store %arg8[%c0_51, %c0_52], %135 {strides = array<i32>} : memref<8x128xf32, #tpu.memory_space<vmem>>, vector<8x128xf32>,
    %c1_i32_53 = arith.constant 1 : i32
    %137 = arith.cmpi eq, %arg1, %c1_i32_53 : i32
    %138 = arith.extui %137 : i1 to i32
    %c0_i32_54 = arith.constant 0 : i32
    %139 = arith.cmpi ne, %138, %c0_i32_54 : i32
    scf.if %139 {
      %c0_55 = arith.constant 0 : index
      %c0_56 = arith.constant 0 : index
      %140 = vector.load %arg7[%c0_55, %c0_56] : memref<8x128xf32, #tpu.memory_space<vmem>>, vector<8x128xf32>
      tpu.vector_store %arg7[%c0_55, %c0_56], %135 {strides = array<i32>} : memref<8x128xf32, #tpu.memory_space<vmem>>, vector<8x128xf32>,
    } else {
    }
    return
  }
  func.func @transform_0(%arg0: i32, %arg1: i32) -> (i32, i32, i32) {
    %c0_i32 = arith.constant 0 : i32
    %c0_i32_0 = arith.constant 0 : i32
    return %arg0, %arg1, %c0_i32 : i32, i32, i32
  }
  func.func @transform_1(%arg0: i32, %arg1: i32) -> (i32, i32) {
    %c0_i32 = arith.constant 0 : i32
    %c0_i32_0 = arith.constant 0 : i32
    %c0_i32_1 = arith.constant 0 : i32
    return %c0_i32, %c0_i32_0 : i32, i32
  }
  func.func @transform_2(%arg0: i32, %arg1: i32) -> (i32, i32) {
    %c0_i32 = arith.constant 0 : i32
    %c0_i32_0 = arith.constant 0 : i32
    %c0_i32_1 = arith.constant 0 : i32
    return %c0_i32, %c0_i32_0 : i32, i32
  }
  func.func @transform_3(%arg0: i32, %arg1: i32) -> (i32, i32) {
    %c0_i32 = arith.constant 0 : i32
    %c0_i32_0 = arith.constant 0 : i32
    %c0_i32_1 = arith.constant 0 : i32
    return %c0_i32, %c0_i32_0 : i32, i32
  }
  func.func @transform_4(%arg0: i32, %arg1: i32) -> (i32, i32) {
    %c0_i32 = arith.constant 0 : i32
    %c0_i32_0 = arith.constant 0 : i32
    %c0_i32_1 = arith.constant 0 : i32
    return %c0_i32, %c0_i32_0 : i32, i32
  }
  func.func @transform_5(%arg0: i32, %arg1: i32) -> (i32, i32) {
    %c0_i32 = arith.constant 0 : i32
    %c0_i32_0 = arith.constant 0 : i32
    return %arg0, %c0_i32 : i32, i32
  }
}

</mosaic_0001>

<llo_original>
// kernel: gru_forward.1
$region0: #{gru_forward.1}
  #allocation0 [shape = 'u32[]', space=smem, size = 0x4, offset = 0x4, fixed_abs, tag = 'smem constant byte address 0x4 - core index']
  #allocation1 [shape = 'u32[72,128]{1,0:T(1,128)}', space=vmem, size = 0x9000, scoped, tag = 'internal scratch']
  #allocation2 [shape = 'f32[8,128]{1,0:T(8,128)}', space=vmem, size = 0x1000, scoped, tag = 'scratch operand']
  #allocation3 [shape = 'f32[32,384]{1,0:T(8,128)}', space=vmem, size = 0xc000, scoped, tag = 'scratch operand']
  %s0 = inlined_call_operand.vmem [shape: f32[1,64,128], index: 0, kind: input, shape index: {}]
  %s1 = inlined_call_operand.vmem [shape: f32[128,384], index: 1, kind: input, shape index: {}]
  %s2 = inlined_call_operand.vmem [shape: f32[1,384], index: 2, kind: input, shape index: {}]
  %s3 = inlined_call_operand.vmem [shape: f32[128,256], index: 3, kind: input, shape index: {}]
  %s4 = inlined_call_operand.vmem [shape: f32[128,128], index: 4, kind: input, shape index: {}]
  %s5 = inlined_call_operand.vmem [shape: f32[8,128], index: 5, kind: output, shape index: {}]
  %s6 = sld [smem:[#allocation0]]
  $region61: #{gru_forward.1} parent=0
    _
  %s8 = ssub.s32 1, %s6
  %s9 = scalar_select 0, %s8, %s6
  loop: start=0, step=1, limit=4
  $region2: #{gru_forward.1} parent=0 // loop_pre_header
    _
  $region3: #{gru_forward.1} parent=0 // loop_header
    %s11 = sphi 0, %s15
    %p12 = scmp.ge.s32.totalorder %s11, 4
    %s18 = sphi 0, %s30
    %s19 = sphi 0, %s26
    %s20 = sphi 0, %s18
    %s21 = sphi 0, %s19
    %s22 = sphi 0, %s20
    %s23 = sphi 0, %s21
    %s35 = sphi 0, %s37
    %s38 = sphi 0, %s35
    %s39 = sphi 0, %s38
    %s55 = sphi 0, %s39
    %s59 = sphi 0, %s59
    %s61 = sphi 0, %s59
    %s62 = sphi 0, %s61
    %s76 = sphi 0, %s62
    %s80 = sphi 0, %s80
    %s82 = sphi 0, %s80
    %s83 = sphi 0, %s82
    %s97 = sphi 0, %s83
    %s101 = sphi 0, %s101
    %s103 = sphi 0, %s101
    %s104 = sphi 0, %s103
    %s118 = sphi 0, %s104
    %s122 = sphi 0, %s122
    %s124 = sphi 0, %s122
    %s125 = sphi 0, %s124
    %s139 = sphi 0, %s125
    %s145 = sphi 0, %s147
    %s148 = sphi 0, %s145
    %s149 = sphi 0, %s148
    %s165 = sphi 0, %s149
  $region4: #{gru_forward.1} parent=0 // loop_header_branch
    %14 = sbr.rel (%p12) target = $region8
  $region5: #{gru_forward.1} parent=0 // loop_body
    %s16 = ssub.s32 %s11, 1
    %s17 = ssub.s32 %s11, 2
    %s24 = sadd.s32 1, %s19
    %p25 = scmp.ge.s32.totalorder %s24, 2
    %s26 = scalar_select %p25, 0, %s24
    %s27 = sadd.s32 1, %s18
    %s28 = scalar_select %p25, %s27, %s18
    %p29 = scmp.ge.s32.totalorder %s28, 1
    %s30 = scalar_select %p29, 0, %s28
    %s31 = ssub.s32 %s18, %s30
    %s32 = ssub.s32 %s19, %s26
    %s33 = sor.u32 %s31, %s32
    %p34 = scmp.eq.s32.totalorder %s33, 0
    %s36 = sadd.s32 %s35, 1
    %s37 = scalar_select %p34, %s35, %s36
    %p40 = pneg %p34
    %p41 = scmp.eq.s32.totalorder %s11, 1
    %p42 = por %p40, %p41
    %p43 = scmp.ne.s32.totalorder %s35, %s38
    %p44 = scmp.eq.s32.totalorder %s11, 0
    %p45 = por %p43, %p44
    %p46 = scmp.ne.s32.totalorder %s35, %s38
    %p47 = scmp.eq.s32.totalorder %s16, 1
    %p48 = por %p46, %p47
    %p49 = scmp.ne.s32.totalorder %s38, %s39
    %p50 = scmp.eq.s32.totalorder %s16, 0
    %p51 = por %p49, %p50
    %p52 = scmp.ne.s32.totalorder %s38, %s39
    %p53 = scmp.eq.s32.totalorder %s17, 1
    %p54 = por %p52, %p53
    %p56 = scmp.ne.s32.totalorder %s39, %s55
    %p57 = scmp.eq.s32.totalorder %s17, 0
    %p58 = por %p56, %p57
    %s60 = sadd.s32 %s59, 1
    %p63 = scmp.eq.s32.totalorder %s11, 1
    %p64 = scmp.ne.s32.totalorder %s59, %s61
    %p65 = scmp.eq.s32.totalorder %s11, 0
    %p66 = por %p64, %p65
    %p67 = scmp.ne.s32.totalorder %s59, %s61
    %p68 = scmp.eq.s32.totalorder %s16, 1
    %p69 = por %p67, %p68
    %p70 = scmp.ne.s32.totalorder %s61, %s62
    %p71 = scmp.eq.s32.totalorder %s16, 0
    %p72 = por %p70, %p71
    %p73 = scmp.ne.s32.totalorder %s61, %s62
    %p74 = scmp.eq.s32.totalorder %s17, 1
    %p75 = por %p73, %p74
    %p77 = scmp.ne.s32.totalorder %s62, %s76
    %p78 = scmp.eq.s32.totalorder %s17, 0
    %p79 = por %p77, %p78
    %s81 = sadd.s32 %s80, 1
    %p84 = scmp.eq.s32.totalorder %s11, 1
    %p85 = scmp.ne.s32.totalorder %s80, %s82
    %p86 = scmp.eq.s32.totalorder %s11, 0
    %p87 = por %p85, %p86
    %p88 = scmp.ne.s32.totalorder %s80, %s82
    %p89 = scmp.eq.s32.totalorder %s16, 1
    %p90 = por %p88, %p89
    %p91 = scmp.ne.s32.totalorder %s82, %s83
    %p92 = scmp.eq.s32.totalorder %s16, 0
    %p93 = por %p91, %p92
    %p94 = scmp.ne.s32.totalorder %s82, %s83
    %p95 = scmp.eq.s32.totalorder %s17, 1
    %p96 = por %p94, %p95
    %p98 = scmp.ne.s32.totalorder %s83, %s97
    %p99 = scmp.eq.s32.totalorder %s17, 0
    %p100 = por %p98, %p99
    %s102 = sadd.s32 %s101, 1
    %p105 = scmp.eq.s32.totalorder %s11, 1
    %p106 = scmp.ne.s32.totalorder %s101, %s103
    %p107 = scmp.eq.s32.totalorder %s11, 0
    %p108 = por %p106, %p107
    %p109 = scmp.ne.s32.totalorder %s101, %s103
    %p110 = scmp.eq.s32.totalorder %s16, 1
    %p111 = por %p109, %p110
    %p112 = scmp.ne.s32.totalorder %s103, %s104
    %p113 = scmp.eq.s32.totalorder %s16, 0
    %p114 = por %p112, %p113
    %p115 = scmp.ne.s32.totalorder %s103, %s104
    %p116 = scmp.eq.s32.totalorder %s17, 1
    %p117 = por %p115, %p116
    %p119 = scmp.ne.s32.totalorder %s104, %s118
    %p120 = scmp.eq.s32.totalorder %s17, 0
    %p121 = por %p119, %p120
    %s123 = sadd.s32 %s122, 1
    %p126 = scmp.eq.s32.totalorder %s11, 1
    %p127 = scmp.ne.s32.totalorder %s122, %s124
    %p128 = scmp.eq.s32.totalorder %s11, 0
    %p129 = por %p127, %p128
    %p130 = scmp.ne.s32.totalorder %s122, %s124
    %p131 = scmp.eq.s32.totalorder %s16, 1
    %p132 = por %p130, %p131
    %p133 = scmp.ne.s32.totalorder %s124, %s125
    %p134 = scmp.eq.s32.totalorder %s16, 0
    %p135 = por %p133, %p134
    %p136 = scmp.ne.s32.totalorder %s124, %s125
    %p137 = scmp.eq.s32.totalorder %s17, 1
    %p138 = por %p136, %p137
    %p140 = scmp.ne.s32.totalorder %s125, %s139
    %p141 = scmp.eq.s32.totalorder %s17, 0
    %p142 = por %p140, %p141
    %s143 = ssub.s32 %s18, %s30
    %p144 = scmp.eq.s32.totalorder %s143, 0
    %s146 = sadd.s32 %s145, 1
    %s147 = scalar_select %p144, %s145, %s146
    %p150 = pneg %p144
    %p151 = scmp.eq.s32.totalorder %s11, 1
    %p152 = por %p150, %p151
    %p153 = scmp.ne.s32.totalorder %s145, %s148
    %p154 = scmp.eq.s32.totalorder %s11, 0
    %p155 = por %p153, %p154
    %p156 = scmp.ne.s32.totalorder %s145, %s148
    %p157 = scmp.eq.s32.totalorder %s16, 1
    %p158 = por %p156, %p157
    %p159 = scmp.ne.s32.totalorder %s148, %s149
    %p160 = scmp.eq.s32.totalorder %s16, 0
    %p161 = por %p159, %p160
    %p162 = scmp.ne.s32.totalorder %s148, %s149
    %p163 = scmp.eq.s32.totalorder %s17, 1
    %p164 = por %p162, %p163
    %p166 = scmp.ne.s32.totalorder %s149, %s165
    %p167 = scmp.eq.s32.totalorder %s17, 0
    %p168 = por %p166, %p167
    %p169 = scmp.le.s32.totalorder 1, %s11
    %p170 = scmp.lt.s32.totalorder %s11, 3
    %p171 = pnand %p169, %p170
    %p172 = pneg %p171
    // Predicated region
    $region9: #{gru_forward.1} parent=5 // pred_check
      _
    $region10: #{gru_forward.1} parent=5 // pred_check_branch
      %174 = sbr.rel (%p171) target = $region12
    $region11: #{gru_forward.1} parent=5 // pred_region
      %s175 = ssub.s32 %s11, 1
      // Predicated region
      $region13: #{gru_forward.1} parent=11 // pred_check
        %p176 = pneg %p72
      $region14: #{gru_forward.1} parent=11 // pred_check_branch
        %178 = sbr.rel (%p176) target = $region16
      $region15: #{gru_forward.1} parent=11 // pred_region
        _
      $region16: #{gru_forward.1} parent=11 // pred_fallthru
        _
      // Predicated region
      $region17: #{gru_forward.1} parent=11 // pred_check
        %p179 = pneg %p93
      $region18: #{gru_forward.1} parent=11 // pred_check_branch
        %181 = sbr.rel (%p179) target = $region20
      $region19: #{gru_forward.1} parent=11 // pred_region
        _
      $region20: #{gru_forward.1} parent=11 // pred_fallthru
        _
      // Predicated region
      $region21: #{gru_forward.1} parent=11 // pred_check
        %p182 = pneg %p114
      $region22: #{gru_forward.1} parent=11 // pred_check_branch
        %184 = sbr.rel (%p182) target = $region24
      $region23: #{gru_forward.1} parent=11 // pred_region
        _
      $region24: #{gru_forward.1} parent=11 // pred_fallthru
        _
      // Predicated region
      $region25: #{gru_forward.1} parent=11 // pred_check
        %p185 = pneg %p135
      $region26: #{gru_forward.1} parent=11 // pred_check_branch
        %187 = sbr.rel (%p185) target = $region28
      $region27: #{gru_forward.1} parent=11 // pred_region
        _
      $region28: #{gru_forward.1} parent=11 // pred_fallthru
        _
    $region12: #{gru_forward.1} parent=5 // pred_fallthru
      _
    %p188 = scmp.lt.s32.totalorder %s11, 2
    // Predicated region
    $region29: #{gru_forward.1} parent=5 // pred_check
      %p189 = pneg %p188
    $region30: #{gru_forward.1} parent=5 // pred_check_branch
      %191 = sbr.rel (%p189) target = $region32
    $region31: #{gru_forward.1} parent=5 // pred_region
      // Predicated region
      $region33: #{gru_forward.1} parent=31 // pred_check
        %p192 = pneg %p45
      $region34: #{gru_forward.1} parent=31 // pred_check_branch
        %194 = sbr.rel (%p192) target = $region36
      $region35: #{gru_forward.1} parent=31 // pred_region
        %s195 = smul.u32 4, %s19
        %p196 = scmp.lt.s32.totalorder %s18, 0
        %s197 = scalar_select %p196, %s18, 0
        %p198 = scmp.lt.s32.totalorder %s195, 7
        %s199 = scalar_select %p198, %s195, 7
        %s200 = smul.addr %s197, 8
        %s201 = sadd.s32 %s199, %s200
        %s202 = smul.addr %s201, 8
        %s203 = scalar_lea.vmem %s0, %s202
        %s204 = smul.u32 4, %s19
      $region36: #{gru_forward.1} parent=31 // pred_fallthru
        _
    $region32: #{gru_forward.1} parent=5 // pred_fallthru
      _
    %p205 = scmp.le.s32.totalorder 1, %s11
    %p206 = scmp.lt.s32.totalorder %s11, 3
    %p207 = pnand %p205, %p206
    %p208 = pneg %p207
    // Predicated region
    $region37: #{gru_forward.1} parent=5 // pred_check
      _
    $region38: #{gru_forward.1} parent=5 // pred_check_branch
      %210 = sbr.rel (%p207) target = $region40
    $region39: #{gru_forward.1} parent=5 // pred_region
      %s211 = ssub.s32 %s11, 1
      %s212 = smul.u32 4, %s21
      %p213 = scmp.lt.s32.totalorder %s20, 0
      %s214 = scalar_select %p213, %s20, 0
      %p215 = scmp.lt.s32.totalorder %s212, 7
      %s216 = scalar_select %p215, %s212, 7
      %s217 = smul.addr %s214, 8
      %s218 = sadd.s32 %s216, %s217
      %s219 = smul.addr %s218, 8
      %s220 = scalar_lea.vmem %s0, %s219
      %p221 = pneg %p51
      %p222 = pneg %p48
      %p223 = pneg %p72
      %p224 = pneg %p69
      %p225 = pneg %p93
      %p226 = pneg %p90
      %p227 = pneg %p114
      %p228 = pneg %p111
      %p229 = pneg %p135
      %p230 = pneg %p132
      %p231 = pneg %p161
      %p232 = pneg %p158
      %p233 = scmp.lt.s32.totalorder %s20, 0
      %s234 = scalar_select %p233, %s20, 0
      %s235 = smul.addr %s234, 8
      %s236 = scalar_lea.vmem %s5, %s235
      %s237 = smul.u32 4, %s21
      %p238 = scmp.lt.s32.totalorder %s20, 0
      %s239 = scalar_select %p238, %s20, 0
      %p240 = scmp.lt.s32.totalorder %s237, 7
      %s241 = scalar_select %p240, %s237, 7
      %s242 = smul.addr %s239, 8
      %s243 = sadd.s32 %s241, %s242
      %s244 = smul.addr %s243, 8
      %s245 = scalar_lea.vmem %s0, %s244
      %s246 = smul.u32 4, %s21
      %p247 = scmp.lt.s32.totalorder %s20, 0
      %s248 = scalar_select %p247, %s20, 0
      %s249 = smul.addr %s248, 8
      %s250 = scalar_lea.vmem %s5, %s249
      %p251 = scmp.eq.s32.totalorder %s21, 0
      // Predicated region
      $region41: #{gru_forward.1} parent=39 // pred_check
        %p252 = pneg %p251
      $region42: #{gru_forward.1} parent=39 // pred_check_branch
        %254 = sbr.rel (%p252) target = $region44
      $region43: #{gru_forward.1} parent=39 // pred_region
        %255 = vst [vmem:[#allocation2] sm:$0xff] 0.0
      $region44: #{gru_forward.1} parent=39 // pred_fallthru
        _
      %v256 = vld [vmem:[%s245] sm:$0xff]
      %v257 = vld [vmem:[%s245 + $0x8] sm:$0xff]
      %v258 = vld [vmem:[%s245 + $0x10] sm:$0xff]
      %v259 = vld [vmem:[%s245 + $0x18] sm:$0xff]
      %v260 = vld [vmem:[%s1] sm:$0xff]
      %v261 = vld [vmem:[%s1 + $0x8] sm:$0xff]
      %v262 = vld [vmem:[%s1 + $0x10] sm:$0xff]
      %v263 = vld [vmem:[%s1 + $0x18] sm:$0xff]
      %v264 = vld [vmem:[%s1 + $0x20] sm:$0xff]
      %v265 = vld [vmem:[%s1 + $0x28] sm:$0xff]
      %v266 = vld [vmem:[%s1 + $0x30] sm:$0xff]
      %v267 = vld [vmem:[%s1 + $0x38] sm:$0xff]
      %v268 = vld [vmem:[%s1 + $0x40] sm:$0xff]
      %v269 = vld [vmem:[%s1 + $0x48] sm:$0xff]
      %v270 = vld [vmem:[%s1 + $0x50] sm:$0xff]
      %v271 = vld [vmem:[%s1 + $0x58] sm:$0xff]
      %v272 = vld [vmem:[%s1 + $0x60] sm:$0xff]
      %v273 = vld [vmem:[%s1 + $0x68] sm:$0xff]
      %v274 = vld [vmem:[%s1 + $0x70] sm:$0xff]
      %v275 = vld [vmem:[%s1 + $0x78] sm:$0xff]
      %v276 = vld [vmem:[%s1 + $0x80] sm:$0xff]
      %v277 = vld [vmem:[%s1 + $0x88] sm:$0xff]
      %v278 = vld [vmem:[%s1 + $0x90] sm:$0xff]
      %v279 = vld [vmem:[%s1 + $0x98] sm:$0xff]
      %v280 = vld [vmem:[%s1 + $0xa0] sm:$0xff]
      %v281 = vld [vmem:[%s1 + $0xa8] sm:$0xff]
      %v282 = vld [vmem:[%s1 + $0xb0] sm:$0xff]
      %v283 = vld [vmem:[%s1 + $0xb8] sm:$0xff]
      %v284 = vld [vmem:[%s1 + $0xc0] sm:$0xff]
      %v285 = vld [vmem:[%s1 + $0xc8] sm:$0xff]
      %v286 = vld [vmem:[%s1 + $0xd0] sm:$0xff]
      %v287 = vld [vmem:[%s1 + $0xd8] sm:$0xff]
      %v288 = vld [vmem:[%s1 + $0xe0] sm:$0xff]
      %v289 = vld [vmem:[%s1 + $0xe8] sm:$0xff]
      %v290 = vld [vmem:[%s1 + $0xf0] sm:$0xff]
      %v291 = vld [vmem:[%s1 + $0xf8] sm:$0xff]
      %v292 = vld [vmem:[%s1 + $0x100] sm:$0xff]
      %v293 = vld [vmem:[%s1 + $0x108] sm:$0xff]
      %v294 = vld [vmem:[%s1 + $0x110] sm:$0xff]
      %v295 = vld [vmem:[%s1 + $0x118] sm:$0xff]
      %v296 = vld [vmem:[%s1 + $0x120] sm:$0xff]
      %v297 = vld [vmem:[%s1 + $0x128] sm:$0xff]
      %v298 = vld [vmem:[%s1 + $0x130] sm:$0xff]
      %v299 = vld [vmem:[%s1 + $0x138] sm:$0xff]
      %v300 = vld [vmem:[%s1 + $0x140] sm:$0xff]
      %v301 = vld [vmem:[%s1 + $0x148] sm:$0xff]
      %v302 = vld [vmem:[%s1 + $0x150] sm:$0xff]
      %v303 = vld [vmem:[%s1 + $0x158] sm:$0xff]
      %v304 = vld [vmem:[%s1 + $0x160] sm:$0xff]
      %v305 = vld [vmem:[%s1 + $0x168] sm:$0xff]
      %v306 = vld [vmem:[%s1 + $0x170] sm:$0xff]
      %v307 = vld [vmem:[%s1 + $0x178] sm:$0xff]
      %v308 = vld [vmem:[%s2] sm:$0x7]
      %v310 = vperm.slane %v308, 0
      %v311 = vperm.slane %v308, 1
      %v312 = vperm.slane %v308, 2
      %316 = vmatpush.msra.mxu0 %v305
      %317 = vmatpush.msra.mxu0 %v302
      %318 = vmatpush.msra.mxu0 %v299
      %319 = vmatpush.msra.mxu0 %v296
      %320 = vmatpush.msra.mxu0 %v293
      %321 = vmatpush.msra.mxu0 %v290
      %322 = vmatpush.msra.mxu0 %v287
      %323 = vmatpush.msra.mxu0 %v284
      %324 = vmatpush.msra.mxu0 %v281
      %325 = vmatpush.msra.mxu0 %v278
      %326 = vmatpush.msra.mxu0 %v275
      %327 = vmatpush.msra.mxu0 %v272
      %328 = vmatpush.msra.mxu0 %v269
      %329 = vmatpush.msra.mxu0 %v266
      %330 = vmatpush.msra.mxu0 %v263
      %331 = vmatpush.msra.mxu0 %v260
      %332 = vmatmul.f32.gmra.mxu0 %v256
      %v333 = vpop.f32.mrf.mxu0
      %v334 = vadd.f32 %v310, %v333
      %335 = vmatmul.f32.gmra.mxu0 %v257
      %v336 = vpop.f32.mrf.mxu0
      %v337 = vadd.f32 %v310, %v336
      %338 = vmatmul.f32.gmra.mxu0 %v258
      %v339 = vpop.f32.mrf.mxu0
      %v340 = vadd.f32 %v310, %v339
      %341 = vmatmul.f32.gmra.mxu0 %v259
      %v342 = vpop.f32.mrf.mxu0
      %v343 = vadd.f32 %v310, %v342
      %344 = vdwg.mxu0
      %345 = vmatpush.msra.mxu0 %v306
      %346 = vmatpush.msra.mxu0 %v303
      %347 = vmatpush.msra.mxu0 %v300
      %348 = vmatpush.msra.mxu0 %v297
      %349 = vmatpush.msra.mxu0 %v294
      %350 = vmatpush.msra.mxu0 %v291
      %351 = vmatpush.msra.mxu0 %v288
      %352 = vmatpush.msra.mxu0 %v285
      %353 = vmatpush.msra.mxu0 %v282
      %354 = vmatpush.msra.mxu0 %v279
      %355 = vmatpush.msra.mxu0 %v276
      %356 = vmatpush.msra.mxu0 %v273
      %357 = vmatpush.msra.mxu0 %v270
      %358 = vmatpush.msra.mxu0 %v267
      %359 = vmatpush.msra.mxu0 %v264
      %360 = vmatpush.msra.mxu0 %v261
      %361 = vmatmul.f32.gmra.mxu0 %v256
      %v362 = vpop.f32.mrf.mxu0
      %v363 = vadd.f32 %v311, %v362
      %364 = vmatmul.f32.gmra.mxu0 %v257
      %v365 = vpop.f32.mrf.mxu0
      %v366 = vadd.f32 %v311, %v365
      %367 = vmatmul.f32.gmra.mxu0 %v258
      %v368 = vpop.f32.mrf.mxu0
      %v369 = vadd.f32 %v311, %v368
      %370 = vmatmul.f32.gmra.mxu0 %v259
      %v371 = vpop.f32.mrf.mxu0
      %v372 = vadd.f32 %v311, %v371
      %373 = vdwg.mxu0
      %374 = vmatpush.msra.mxu0 %v307
      %375 = vmatpush.msra.mxu0 %v304
      %376 = vmatpush.msra.mxu0 %v301
      %377 = vmatpush.msra.mxu0 %v298
      %378 = vmatpush.msra.mxu0 %v295
      %379 = vmatpush.msra.mxu0 %v292
      %380 = vmatpush.msra.mxu0 %v289
      %381 = vmatpush.msra.mxu0 %v286
      %382 = vmatpush.msra.mxu0 %v283
      %383 = vmatpush.msra.mxu0 %v280
      %384 = vmatpush.msra.mxu0 %v277
      %385 = vmatpush.msra.mxu0 %v274
      %386 = vmatpush.msra.mxu0 %v271
      %387 = vmatpush.msra.mxu0 %v268
      %388 = vmatpush.msra.mxu0 %v265
      %389 = vmatpush.msra.mxu0 %v262
      %390 = vmatmul.f32.gmra.mxu0 %v256
      %v391 = vpop.f32.mrf.mxu0
      %v392 = vadd.f32 %v312, %v391
      %393 = vmatmul.f32.gmra.mxu0 %v257
      %v394 = vpop.f32.mrf.mxu0
      %v395 = vadd.f32 %v312, %v394
      %396 = vmatmul.f32.gmra.mxu0 %v258
      %v397 = vpop.f32.mrf.mxu0
      %v398 = vadd.f32 %v312, %v397
      %399 = vmatmul.f32.gmra.mxu0 %v259
      %v400 = vpop.f32.mrf.mxu0
      %v401 = vadd.f32 %v312, %v400
      %402 = vdwg.mxu0
      %403 = vst [vmem:[#allocation3] sm:$0xff] %v334
      %404 = vst [vmem:[#allocation3 + $0x8] sm:$0xff] %v363
      %405 = vst [vmem:[#allocation3 + $0x10] sm:$0xff] %v392
      %406 = vst [vmem:[#allocation3 + $0x18] sm:$0xff] %v337
      %407 = vst [vmem:[#allocation3 + $0x20] sm:$0xff] %v366
      %408 = vst [vmem:[#allocation3 + $0x28] sm:$0xff] %v395
      %409 = vst [vmem:[#allocation3 + $0x30] sm:$0xff] %v340
      %410 = vst [vmem:[#allocation3 + $0x38] sm:$0xff] %v369
      %411 = vst [vmem:[#allocation3 + $0x40] sm:$0xff] %v398
      %412 = vst [vmem:[#allocation3 + $0x48] sm:$0xff] %v343
      %413 = vst [vmem:[#allocation3 + $0x50] sm:$0xff] %v372
      %414 = vst [vmem:[#allocation3 + $0x58] sm:$0xff] %v401
      %v415 = vld [vmem:[#allocation2] sm:$0xff]
      %s416 = smul.u32 0, 3
      %s417 = smul.addr %s416, 8
      %s418 = scalar_lea.vmem [#allocation3], %s417
      %v419 = vld [vmem:[%s418] sm:$0xff]
      %v420 = vld [vmem:[%s418 + $0x8] sm:$0xff]
      %v421 = vld [vmem:[%s418 + $0x10] sm:$0xff]
      %v422 = vld [vmem:[%s3] sm:$0xff]
      %v423 = vld [vmem:[%s3 + $0x8] sm:$0xff]
      %v424 = vld [vmem:[%s3 + $0x10] sm:$0xff]
      %v425 = vld [vmem:[%s3 + $0x18] sm:$0xff]
      %v426 = vld [vmem:[%s3 + $0x20] sm:$0xff]
      %v427 = vld [vmem:[%s3 + $0x28] sm:$0xff]
      %v428 = vld [vmem:[%s3 + $0x30] sm:$0xff]
      %v429 = vld [vmem:[%s3 + $0x38] sm:$0xff]
      %v430 = vld [vmem:[%s3 + $0x40] sm:$0xff]
      %v431 = vld [vmem:[%s3 + $0x48] sm:$0xff]
      %v432 = vld [vmem:[%s3 + $0x50] sm:$0xff]
      %v433 = vld [vmem:[%s3 + $0x58] sm:$0xff]
      %v434 = vld [vmem:[%s3 + $0x60] sm:$0xff]
      %v435 = vld [vmem:[%s3 + $0x68] sm:$0xff]
      %v436 = vld [vmem:[%s3 + $0x70] sm:$0xff]
      %v437 = vld [vmem:[%s3 + $0x78] sm:$0xff]
      %v438 = vld [vmem:[%s3 + $0x80] sm:$0xff]
      %v439 = vld [vmem:[%s3 + $0x88] sm:$0xff]
      %v440 = vld [vmem:[%s3 + $0x90] sm:$0xff]
      %v441 = vld [vmem:[%s3 + $0x98] sm:$0xff]
      %v442 = vld [vmem:[%s3 + $0xa0] sm:$0xff]
      %v443 = vld [vmem:[%s3 + $0xa8] sm:$0xff]
      %v444 = vld [vmem:[%s3 + $0xb0] sm:$0xff]
      %v445 = vld [vmem:[%s3 + $0xb8] sm:$0xff]
      %v446 = vld [vmem:[%s3 + $0xc0] sm:$0xff]
      %v447 = vld [vmem:[%s3 + $0xc8] sm:$0xff]
      %v448 = vld [vmem:[%s3 + $0xd0] sm:$0xff]
      %v449 = vld [vmem:[%s3 + $0xd8] sm:$0xff]
      %v450 = vld [vmem:[%s3 + $0xe0] sm:$0xff]
      %v451 = vld [vmem:[%s3 + $0xe8] sm:$0xff]
      %v452 = vld [vmem:[%s3 + $0xf0] sm:$0xff]
      %v453 = vld [vmem:[%s3 + $0xf8] sm:$0xff]
      %454 = vmatpush.msra.mxu0 %v452
      %455 = vmatpush.msra.mxu0 %v450
      %456 = vmatpush.msra.mxu0 %v448
      %457 = vmatpush.msra.mxu0 %v446
      %458 = vmatpush.msra.mxu0 %v444
      %459 = vmatpush.msra.mxu0 %v442
      %460 = vmatpush.msra.mxu0 %v440
      %461 = vmatpush.msra.mxu0 %v438
      %462 = vmatpush.msra.mxu0 %v436
      %463 = vmatpush.msra.mxu0 %v434
      %464 = vmatpush.msra.mxu0 %v432
      %465 = vmatpush.msra.mxu0 %v430
      %466 = vmatpush.msra.mxu0 %v428
      %467 = vmatpush.msra.mxu0 %v426
      %468 = vmatpush.msra.mxu0 %v424
      %469 = vmatpush.msra.mxu0 %v422
      %470 = vmatmul.f32.gmra.mxu0 %v415
      %v471 = vpop.f32.mrf.mxu0
      %v472 = vadd.f32 0.0, %v471
      %473 = vdwg.mxu0
      %474 = vmatpush.msra.mxu0 %v453
      %475 = vmatpush.msra.mxu0 %v451
      %476 = vmatpush.msra.mxu0 %v449
      %477 = vmatpush.msra.mxu0 %v447
      %478 = vmatpush.msra.mxu0 %v445
      %479 = vmatpush.msra.mxu0 %v443
      %480 = vmatpush.msra.mxu0 %v441
      %481 = vmatpush.msra.mxu0 %v439
      %482 = vmatpush.msra.mxu0 %v437
      %483 = vmatpush.msra.mxu0 %v435
      %484 = vmatpush.msra.mxu0 %v433
      %485 = vmatpush.msra.mxu0 %v431
      %486 = vmatpush.msra.mxu0 %v429
      %487 = vmatpush.msra.mxu0 %v427
      %488 = vmatpush.msra.mxu0 %v425
      %489 = vmatpush.msra.mxu0 %v423
      %490 = vmatmul.f32.gmra.mxu0 %v415
      %v491 = vpop.f32.mrf.mxu0
      %v492 = vadd.f32 0.0, %v491
      %493 = vdwg.mxu0
      %v494 = vadd.f32 %v419, %v472
      %v495 = vxor.u32 %v494, 2147483648
      %v496 = vmul.f32 %v495, 1.442695
      %v497 = vpow.pop %v496
      %v498 = vadd.f32 %v497, 1.0
      %v499 = vrcp.pop %v498
      %v500 = vmul.f32 %v498, %v499
      %v501 = vsub.f32 1.0, %v500
      %v502 = vmul.f32 %v499, %v501
      %v503 = vadd.f32 %v499, %v502
      %vm504 = vweird.f32 %v498
      %vm505 = vweird.f32 %v499
      %vm506 = vmor %vm504, %vm505
      %v507 = vsel %vm506, %v499, %v503
      %v508 = vand.u32 2147483647, %v498
      %vm509 = vcmp.eq.f32.partialorder %v508, 8.507059e+37
      %v510 = vand.u32 %v498, 2147483648
      %v511 = vor.u32 1.1754944e-38, %v510
      %v512 = vsel %vm509, %v511, %v507
      %v513 = vmul.f32 1.0, %v512
      %v514 = vadd.f32 %v420, %v492
      %v515 = vxor.u32 %v514, 2147483648
      %v516 = vmul.f32 %v515, 1.442695
      %v517 = vpow.pop %v516
      %v518 = vadd.f32 %v517, 1.0
      %v519 = vrcp.pop %v518
      %v520 = vmul.f32 %v518, %v519
      %v521 = vsub.f32 1.0, %v520
      %v522 = vmul.f32 %v519, %v521
      %v523 = vadd.f32 %v519, %v522
      %vm524 = vweird.f32 %v518
      %vm525 = vweird.f32 %v519
      %vm526 = vmor %vm524, %vm525
      %v527 = vsel %vm526, %v519, %v523
      %v528 = vand.u32 2147483647, %v518
      %vm529 = vcmp.eq.f32.partialorder %v528, 8.507059e+37
      %v530 = vand.u32 %v518, 2147483648
      %v531 = vor.u32 1.1754944e-38, %v530
      %v532 = vsel %vm529, %v531, %v527
      %v533 = vmul.f32 1.0, %v532
      %v534 = vmul.f32 %v533, %v415
      %v535 = vld [vmem:[%s4] sm:$0xff]
      %v536 = vld [vmem:[%s4 + $0x8] sm:$0xff]
      %v537 = vld [vmem:[%s4 + $0x10] sm:$0xff]
      %v538 = vld [vmem:[%s4 + $0x18] sm:$0xff]
      %v539 = vld [vmem:[%s4 + $0x20] sm:$0xff]
      %v540 = vld [vmem:[%s4 + $0x28] sm:$0xff]
      %v541 = vld [vmem:[%s4 + $0x30] sm:$0xff]
      %v542 = vld [vmem:[%s4 + $0x38] sm:$0xff]
      %v543 = vld [vmem:[%s4 + $0x40] sm:$0xff]
      %v544 = vld [vmem:[%s4 + $0x48] sm:$0xff]
      %v545 = vld [vmem:[%s4 + $0x50] sm:$0xff]
      %v546 = vld [vmem:[%s4 + $0x58] sm:$0xff]
      %v547 = vld [vmem:[%s4 + $0x60] sm:$0xff]
      %v548 = vld [vmem:[%s4 + $0x68] sm:$0xff]
      %v549 = vld [vmem:[%s4 + $0x70] sm:$0xff]
      %v550 = vld [vmem:[%s4 + $0x78] sm:$0xff]
      %551 = vmatpush.msra.mxu0 %v550
      %552 = vmatpush.msra.mxu0 %v549
      %553 = vmatpush.msra.mxu0 %v548
      %554 = vmatpush.msra.mxu0 %v547
      %555 = vmatpush.msra.mxu0 %v546
      %556 = vmatpush.msra.mxu0 %v545
      %557 = vmatpush.msra.mxu0 %v544
      %558 = vmatpush.msra.mxu0 %v543
      %559 = vmatpush.msra.mxu0 %v542
      %560 = vmatpush.msra.mxu0 %v541
      %561 = vmatpush.msra.mxu0 %v540
      %562 = vmatpush.msra.mxu0 %v539
      %563 = vmatpush.msra.mxu0 %v538
      %564 = vmatpush.msra.mxu0 %v537
      %565 = vmatpush.msra.mxu0 %v536
      %566 = vmatpush.msra.mxu0 %v535
      %567 = vmatmul.f32.gmra.mxu0 %v534
      %v568 = vpop.f32.mrf.mxu0
      %v569 = vadd.f32 0.0, %v568
      %570 = vdwg.mxu0
      %v571 = vadd.f32 %v421, %v569
      %v572 = vtanh.pop %v571
      %v573 = vsub.f32 %v572, %v415
      %v574 = vmul.f32 %v513, %v573
      %v575 = vadd.f32 %v415, %v574
      %s576 = smul.u32 1, 3
      %s577 = smul.addr %s576, 8
      %s578 = scalar_lea.vmem [#allocation3], %s577
      %v579 = vld [vmem:[%s578] sm:$0xff]
      %v580 = vld [vmem:[%s578 + $0x8] sm:$0xff]
      %v581 = vld [vmem:[%s578 + $0x10] sm:$0xff]
      %582 = vmatpush.msra.mxu0 %v452
      %583 = vmatpush.msra.mxu0 %v450
      %584 = vmatpush.msra.mxu0 %v448
      %585 = vmatpush.msra.mxu0 %v446
      %586 = vmatpush.msra.mxu0 %v444
      %587 = vmatpush.msra.mxu0 %v442
      %588 = vmatpush.msra.mxu0 %v440
      %589 = vmatpush.msra.mxu0 %v438
      %590 = vmatpush.msra.mxu0 %v436
      %591 = vmatpush.msra.mxu0 %v434
      %592 = vmatpush.msra.mxu0 %v432
      %593 = vmatpush.msra.mxu0 %v430
      %594 = vmatpush.msra.mxu0 %v428
      %595 = vmatpush.msra.mxu0 %v426
      %596 = vmatpush.msra.mxu0 %v424
      %597 = vmatpush.msra.mxu0 %v422
      %598 = vmatmul.f32.gmra.mxu0 %v575
      %v599 = vpop.f32.mrf.mxu0
      %v600 = vadd.f32 0.0, %v599
      %601 = vdwg.mxu0
      %602 = vmatpush.msra.mxu0 %v453
      %603 = vmatpush.msra.mxu0 %v451
      %604 = vmatpush.msra.mxu0 %v449
      %605 = vmatpush.msra.mxu0 %v447
      %606 = vmatpush.msra.mxu0 %v445
      %607 = vmatpush.msra.mxu0 %v443
      %608 = vmatpush.msra.mxu0 %v441
      %609 = vmatpush.msra.mxu0 %v439
      %610 = vmatpush.msra.mxu0 %v437
      %611 = vmatpush.msra.mxu0 %v435
      %612 = vmatpush.msra.mxu0 %v433
      %613 = vmatpush.msra.mxu0 %v431
      %614 = vmatpush.msra.mxu0 %v429
      %615 = vmatpush.msra.mxu0 %v427
      %616 = vmatpush.msra.mxu0 %v425
      %617 = vmatpush.msra.mxu0 %v423
      %618 = vmatmul.f32.gmra.mxu0 %v575
      %v619 = vpop.f32.mrf.mxu0
      %v620 = vadd.f32 0.0, %v619
      %621 = vdwg.mxu0
      %v622 = vadd.f32 %v579, %v600
      %v623 = vxor.u32 %v622, 2147483648
      %v624 = vmul.f32 %v623, 1.442695
      %v625 = vpow.pop %v624
      %v626 = vadd.f32 %v625, 1.0
      %v627 = vrcp.pop %v626
      %v628 = vmul.f32 %v626, %v627
      %v629 = vsub.f32 1.0, %v628
      %v630 = vmul.f32 %v627, %v629
      %v631 = vadd.f32 %v627, %v630
      %vm632 = vweird.f32 %v626
      %vm633 = vweird.f32 %v627
      %vm634 = vmor %vm632, %vm633
      %v635 = vsel %vm634, %v627, %v631
      %v636 = vand.u32 2147483647, %v626
      %vm637 = vcmp.eq.f32.partialorder %v636, 8.507059e+37
      %v638 = vand.u32 %v626, 2147483648
      %v639 = vor.u32 1.1754944e-38, %v638
      %v640 = vsel %vm637, %v639, %v635
      %v641 = vmul.f32 1.0, %v640
      %v642 = vadd.f32 %v580, %v620
      %v643 = vxor.u32 %v642, 2147483648
      %v644 = vmul.f32 %v643, 1.442695
      %v645 = vpow.pop %v644
      %v646 = vadd.f32 %v645, 1.0
      %v647 = vrcp.pop %v646
      %v648 = vmul.f32 %v646, %v647
      %v649 = vsub.f32 1.0, %v648
      %v650 = vmul.f32 %v647, %v649
      %v651 = vadd.f32 %v647, %v650
      %vm652 = vweird.f32 %v646
      %vm653 = vweird.f32 %v647
      %vm654 = vmor %vm652, %vm653
      %v655 = vsel %vm654, %v647, %v651
      %v656 = vand.u32 2147483647, %v646
      %vm657 = vcmp.eq.f32.partialorder %v656, 8.507059e+37
      %v658 = vand.u32 %v646, 2147483648
      %v659 = vor.u32 1.1754944e-38, %v658
      %v660 = vsel %vm657, %v659, %v655
      %v661 = vmul.f32 1.0, %v660
      %v662 = vmul.f32 %v661, %v575
      %663 = vmatpush.msra.mxu0 %v550
      %664 = vmatpush.msra.mxu0 %v549
      %665 = vmatpush.msra.mxu0 %v548
      %666 = vmatpush.msra.mxu0 %v547
      %667 = vmatpush.msra.mxu0 %v546
      %668 = vmatpush.msra.mxu0 %v545
      %669 = vmatpush.msra.mxu0 %v544
      %670 = vmatpush.msra.mxu0 %v543
      %671 = vmatpush.msra.mxu0 %v542
      %672 = vmatpush.msra.mxu0 %v541
      %673 = vmatpush.msra.mxu0 %v540
      %674 = vmatpush.msra.mxu0 %v539
      %675 = vmatpush.msra.mxu0 %v538
      %676 = vmatpush.msra.mxu0 %v537
      %677 = vmatpush.msra.mxu0 %v536
      %678 = vmatpush.msra.mxu0 %v535
      %679 = vmatmul.f32.gmra.mxu0 %v662
      %v680 = vpop.f32.mrf.mxu0
      %v681 = vadd.f32 0.0, %v680
      %682 = vdwg.mxu0
      %v683 = vadd.f32 %v581, %v681
      %v684 = vtanh.pop %v683
      %v685 = vsub.f32 %v684, %v575
      %v686 = vmul.f32 %v641, %v685
      %v687 = vadd.f32 %v575, %v686
      %s688 = smul.u32 2, 3
      %s689 = smul.addr %s688, 8
      %s690 = scalar_lea.vmem [#allocation3], %s689
      %v691 = vld [vmem:[%s690] sm:$0xff]
      %v692 = vld [vmem:[%s690 + $0x8] sm:$0xff]
      %v693 = vld [vmem:[%s690 + $0x10] sm:$0xff]
      %694 = vmatpush.msra.mxu0 %v452
      %695 = vmatpush.msra.mxu0 %v450
      %696 = vmatpush.msra.mxu0 %v448
      %697 = vmatpush.msra.mxu0 %v446
      %698 = vmatpush.msra.mxu0 %v444
      %699 = vmatpush.msra.mxu0 %v442
      %700 = vmatpush.msra.mxu0 %v440
      %701 = vmatpush.msra.mxu0 %v438
      %702 = vmatpush.msra.mxu0 %v436
      %703 = vmatpush.msra.mxu0 %v434
      %704 = vmatpush.msra.mxu0 %v432
      %705 = vmatpush.msra.mxu0 %v430
      %706 = vmatpush.msra.mxu0 %v428
      %707 = vmatpush.msra.mxu0 %v426
      %708 = vmatpush.msra.mxu0 %v424
      %709 = vmatpush.msra.mxu0 %v422
      %710 = vmatmul.f32.gmra.mxu0 %v687
      %v711 = vpop.f32.mrf.mxu0
      %v712 = vadd.f32 0.0, %v711
      %713 = vdwg.mxu0
      %714 = vmatpush.msra.mxu0 %v453
      %715 = vmatpush.msra.mxu0 %v451
      %716 = vmatpush.msra.mxu0 %v449
      %717 = vmatpush.msra.mxu0 %v447
      %718 = vmatpush.msra.mxu0 %v445
      %719 = vmatpush.msra.mxu0 %v443
      %720 = vmatpush.msra.mxu0 %v441
      %721 = vmatpush.msra.mxu0 %v439
      %722 = vmatpush.msra.mxu0 %v437
      %723 = vmatpush.msra.mxu0 %v435
      %724 = vmatpush.msra.mxu0 %v433
      %725 = vmatpush.msra.mxu0 %v431
      %726 = vmatpush.msra.mxu0 %v429
      %727 = vmatpush.msra.mxu0 %v427
      %728 = vmatpush.msra.mxu0 %v425
      %729 = vmatpush.msra.mxu0 %v423
      %730 = vmatmul.f32.gmra.mxu0 %v687
      %v731 = vpop.f32.mrf.mxu0
      %v732 = vadd.f32 0.0, %v731
      %733 = vdwg.mxu0
      %v734 = vadd.f32 %v691, %v712
      %v735 = vxor.u32 %v734, 2147483648
      %v736 = vmul.f32 %v735, 1.442695
      %v737 = vpow.pop %v736
      %v738 = vadd.f32 %v737, 1.0
      %v739 = vrcp.pop %v738
      %v740 = vmul.f32 %v738, %v739
      %v741 = vsub.f32 1.0, %v740
      %v742 = vmul.f32 %v739, %v741
      %v743 = vadd.f32 %v739, %v742
      %vm744 = vweird.f32 %v738
      %vm745 = vweird.f32 %v739
      %vm746 = vmor %vm744, %vm745
      %v747 = vsel %vm746, %v739, %v743
      %v748 = vand.u32 2147483647, %v738
      %vm749 = vcmp.eq.f32.partialorder %v748, 8.507059e+37
      %v750 = vand.u32 %v738, 2147483648
      %v751 = vor.u32 1.1754944e-38, %v750
      %v752 = vsel %vm749, %v751, %v747
      %v753 = vmul.f32 1.0, %v752
      %v754 = vadd.f32 %v692, %v732
      %v755 = vxor.u32 %v754, 2147483648
      %v756 = vmul.f32 %v755, 1.442695
      %v757 = vpow.pop %v756
      %v758 = vadd.f32 %v757, 1.0
      %v759 = vrcp.pop %v758
      %v760 = vmul.f32 %v758, %v759
      %v761 = vsub.f32 1.0, %v760
      %v762 = vmul.f32 %v759, %v761
      %v763 = vadd.f32 %v759, %v762
      %vm764 = vweird.f32 %v758
      %vm765 = vweird.f32 %v759
      %vm766 = vmor %vm764, %vm765
      %v767 = vsel %vm766, %v759, %v763
      %v768 = vand.u32 2147483647, %v758
      %vm769 = vcmp.eq.f32.partialorder %v768, 8.507059e+37
      %v770 = vand.u32 %v758, 2147483648
      %v771 = vor.u32 1.1754944e-38, %v770
      %v772 = vsel %vm769, %v771, %v767
      %v773 = vmul.f32 1.0, %v772
      %v774 = vmul.f32 %v773, %v687
      %775 = vmatpush.msra.mxu0 %v550
      %776 = vmatpush.msra.mxu0 %v549
      %777 = vmatpush.msra.mxu0 %v548
      %778 = vmatpush.msra.mxu0 %v547
      %779 = vmatpush.msra.mxu0 %v546
      %780 = vmatpush.msra.mxu0 %v545
      %781 = vmatpush.msra.mxu0 %v544
      %782 = vmatpush.msra.mxu0 %v543
      %783 = vmatpush.msra.mxu0 %v542
      %784 = vmatpush.msra.mxu0 %v541
      %785 = vmatpush.msra.mxu0 %v540
      %786 = vmatpush.msra.mxu0 %v539
      %787 = vmatpush.msra.mxu0 %v538
      %788 = vmatpush.msra.mxu0 %v537
      %789 = vmatpush.msra.mxu0 %v536
      %790 = vmatpush.msra.mxu0 %v535
      %791 = vmatmul.f32.gmra.mxu0 %v774
      %v792 = vpop.f32.mrf.mxu0
      %v793 = vadd.f32 0.0, %v792
      %794 = vdwg.mxu0
      %v795 = vadd.f32 %v693, %v793
      %v796 = vtanh.pop %v795
      %v797 = vsub.f32 %v796, %v687
      %v798 = vmul.f32 %v753, %v797
      %v799 = vadd.f32 %v687, %v798
      %s800 = smul.u32 3, 3
      %s801 = smul.addr %s800, 8
      %s802 = scalar_lea.vmem [#allocation3], %s801
      %v803 = vld [vmem:[%s802] sm:$0xff]
      %v804 = vld [vmem:[%s802 + $0x8] sm:$0xff]
      %v805 = vld [vmem:[%s802 + $0x10] sm:$0xff]
      %806 = vmatpush.msra.mxu0 %v452
      %807 = vmatpush.msra.mxu0 %v450
      %808 = vmatpush.msra.mxu0 %v448
      %809 = vmatpush.msra.mxu0 %v446
      %810 = vmatpush.msra.mxu0 %v444
      %811 = vmatpush.msra.mxu0 %v442
      %812 = vmatpush.msra.mxu0 %v440
      %813 = vmatpush.msra.mxu0 %v438
      %814 = vmatpush.msra.mxu0 %v436
      %815 = vmatpush.msra.mxu0 %v434
      %816 = vmatpush.msra.mxu0 %v432
      %817 = vmatpush.msra.mxu0 %v430
      %818 = vmatpush.msra.mxu0 %v428
      %819 = vmatpush.msra.mxu0 %v426
      %820 = vmatpush.msra.mxu0 %v424
      %821 = vmatpush.msra.mxu0 %v422
      %822 = vmatmul.f32.gmra.mxu0 %v799
      %v823 = vpop.f32.mrf.mxu0
      %v824 = vadd.f32 0.0, %v823
      %825 = vdwg.mxu0
      %826 = vmatpush.msra.mxu0 %v453
      %827 = vmatpush.msra.mxu0 %v451
      %828 = vmatpush.msra.mxu0 %v449
      %829 = vmatpush.msra.mxu0 %v447
      %830 = vmatpush.msra.mxu0 %v445
      %831 = vmatpush.msra.mxu0 %v443
      %832 = vmatpush.msra.mxu0 %v441
      %833 = vmatpush.msra.mxu0 %v439
      %834 = vmatpush.msra.mxu0 %v437
      %835 = vmatpush.msra.mxu0 %v435
      %836 = vmatpush.msra.mxu0 %v433
      %837 = vmatpush.msra.mxu0 %v431
      %838 = vmatpush.msra.mxu0 %v429
      %839 = vmatpush.msra.mxu0 %v427
      %840 = vmatpush.msra.mxu0 %v425
      %841 = vmatpush.msra.mxu0 %v423
      %842 = vmatmul.f32.gmra.mxu0 %v799
      %v843 = vpop.f32.mrf.mxu0
      %v844 = vadd.f32 0.0, %v843
      %845 = vdwg.mxu0
      %v846 = vadd.f32 %v803, %v824
      %v847 = vxor.u32 %v846, 2147483648
      %v848 = vmul.f32 %v847, 1.442695
      %v849 = vpow.pop %v848
      %v850 = vadd.f32 %v849, 1.0
      %v851 = vrcp.pop %v850
      %v852 = vmul.f32 %v850, %v851
      %v853 = vsub.f32 1.0, %v852
      %v854 = vmul.f32 %v851, %v853
      %v855 = vadd.f32 %v851, %v854
      %vm856 = vweird.f32 %v850
      %vm857 = vweird.f32 %v851
      %vm858 = vmor %vm856, %vm857
      %v859 = vsel %vm858, %v851, %v855
      %v860 = vand.u32 2147483647, %v850
      %vm861 = vcmp.eq.f32.partialorder %v860, 8.507059e+37
      %v862 = vand.u32 %v850, 2147483648
      %v863 = vor.u32 1.1754944e-38, %v862
      %v864 = vsel %vm861, %v863, %v859
      %v865 = vmul.f32 1.0, %v864
      %v866 = vadd.f32 %v804, %v844
      %v867 = vxor.u32 %v866, 2147483648
      %v868 = vmul.f32 %v867, 1.442695
      %v869 = vpow.pop %v868
      %v870 = vadd.f32 %v869, 1.0
      %v871 = vrcp.pop %v870
      %v872 = vmul.f32 %v870, %v871
      %v873 = vsub.f32 1.0, %v872
      %v874 = vmul.f32 %v871, %v873
      %v875 = vadd.f32 %v871, %v874
      %vm876 = vweird.f32 %v870
      %vm877 = vweird.f32 %v871
      %vm878 = vmor %vm876, %vm877
      %v879 = vsel %vm878, %v871, %v875
      %v880 = vand.u32 2147483647, %v870
      %vm881 = vcmp.eq.f32.partialorder %v880, 8.507059e+37
      %v882 = vand.u32 %v870, 2147483648
      %v883 = vor.u32 1.1754944e-38, %v882
      %v884 = vsel %vm881, %v883, %v879
      %v885 = vmul.f32 1.0, %v884
      %v886 = vmul.f32 %v885, %v799
      %887 = vmatpush.msra.mxu0 %v550
      %888 = vmatpush.msra.mxu0 %v549
      %889 = vmatpush.msra.mxu0 %v548
      %890 = vmatpush.msra.mxu0 %v547
      %891 = vmatpush.msra.mxu0 %v546
      %892 = vmatpush.msra.mxu0 %v545
      %893 = vmatpush.msra.mxu0 %v544
      %894 = vmatpush.msra.mxu0 %v543
      %895 = vmatpush.msra.mxu0 %v542
      %896 = vmatpush.msra.mxu0 %v541
      %897 = vmatpush.msra.mxu0 %v540
      %898 = vmatpush.msra.mxu0 %v539
      %899 = vmatpush.msra.mxu0 %v538
      %900 = vmatpush.msra.mxu0 %v537
      %901 = vmatpush.msra.mxu0 %v536
      %902 = vmatpush.msra.mxu0 %v535
      %903 = vmatmul.f32.gmra.mxu0 %v886
      %v904 = vpop.f32.mrf.mxu0
      %v905 = vadd.f32 0.0, %v904
      %906 = vdwg.mxu0
      %v907 = vadd.f32 %v805, %v905
      %v908 = vtanh.pop %v907
      %v909 = vsub.f32 %v908, %v799
      %v910 = vmul.f32 %v865, %v909
      %v911 = vadd.f32 %v799, %v910
      %912 = vst [vmem:[#allocation2] sm:$0xff] %v911
      %p913 = scmp.eq.s32.totalorder %s21, 1
      // Predicated region
      $region45: #{gru_forward.1} parent=39 // pred_check
        %p914 = pneg %p913
      $region46: #{gru_forward.1} parent=39 // pred_check_branch
        %916 = sbr.rel (%p914) target = $region48
      $region47: #{gru_forward.1} parent=39 // pred_region
        %917 = vst [vmem:[%s250] sm:$0xff] %v911
      $region48: #{gru_forward.1} parent=39 // pred_fallthru
        _
      %p918 = scmp.lt.s32.totalorder %s20, 0
      %s919 = scalar_select %p918, %s20, 0
      %s920 = smul.addr %s919, 8
      %s921 = scalar_lea.vmem %s5, %s920
      // Predicated region
      $region49: #{gru_forward.1} parent=39 // pred_check
        %p922 = pneg %p158
      $region50: #{gru_forward.1} parent=39 // pred_check_branch
        %924 = sbr.rel (%p922) target = $region52
      $region51: #{gru_forward.1} parent=39 // pred_region
        _
      $region52: #{gru_forward.1} parent=39 // pred_fallthru
        _
      // Predicated region
      $region53: #{gru_forward.1} parent=39 // pred_check
        %p925 = pneg %p158
      $region54: #{gru_forward.1} parent=39 // pred_check_branch
        %927 = sbr.rel (%p925) target = $region56
      $region55: #{gru_forward.1} parent=39 // pred_region
        %p928 = scmp.lt.s32.totalorder %s20, 0
        %s929 = scalar_select %p928, %s20, 0
        %s930 = smul.addr %s929, 8
        %s931 = scalar_lea.vmem %s5, %s930
      $region56: #{gru_forward.1} parent=39 // pred_fallthru
        _
    $region40: #{gru_forward.1} parent=5 // pred_fallthru
      _
    %p932 = scmp.le.s32.totalorder 2, %s11
    // Predicated region
    $region57: #{gru_forward.1} parent=5 // pred_check
      %p933 = pneg %p932
    $region58: #{gru_forward.1} parent=5 // pred_check_branch
      %935 = sbr.rel (%p933) target = $region60
    $region59: #{gru_forward.1} parent=5 // pred_region
      %s936 = ssub.s32 %s11, 2
    $region60: #{gru_forward.1} parent=5 // pred_fallthru
      _
  $region6: #{gru_forward.1} parent=0 // loop_footer
    %s15 = sadd.s32 1, %s11
  $region7: #{gru_forward.1} parent=0 // loop_footer_branch
    %10 = sbr.rel target = $region3
  $region8: #{gru_forward.1} parent=0 // loop_exit
    _

</llo_original>
